<compile_context>
chip_gen: v5e
topology: v5e:2x2
jax: 0.10.0
libtpu: 0.0.40
codegen_flags: <defaults>
</compile_context>

<pallas_src>
import math

import jax
import jax.numpy as jnp
from jax.experimental import pallas as pl
from jax.experimental.pallas import tpu as pltpu


_SQRT_2_OVER_PI = math.sqrt(2.0 / math.pi)


def _round_up(x, m):
    return (x + m - 1) // m * m


def _gelu_tanh(h):
    # 0.5*h*(1 + tanh(c*(h + 0.044715*h^3))), fused to drop one multiply.
    hh = 0.5 * h
    return hh + hh * jnp.tanh(_SQRT_2_OVER_PI * (h + 0.044715 * (h * h * h)))


# --------------------------------------------------------------------------
# Kernels
# --------------------------------------------------------------------------

def _ffn_resident_kernel(x_ref, w1_ref, b1_ref, w2_ref, b2_ref, o_ref):
    # Weights-resident path: W1/W2 are full blocks with constant index_maps,
    # so they are DMA'd once and reused across every row tile.
    # x_ref : (tm, dm_p)   w1_ref: (dm_p, dff_p)   b1_ref: (1, dff_p)
    # w2_ref: (dff_p, dm_p) b2_ref: (1, dm_p)      o_ref : (tm, dm_p)
    h = jnp.dot(x_ref[...], w1_ref[...],
                preferred_element_type=jnp.float32) + b1_ref[...]
    g = _gelu_tanh(h)
    # dropout == identity in eval mode
    y = jnp.dot(g.astype(w2_ref.dtype), w2_ref[...],
                preferred_element_type=jnp.float32)
    o_ref[...] = (y + b2_ref[...]).astype(o_ref.dtype)


def _ffn_tiled_kernel(x_ref, w1_ref, b1_ref, w2_ref, b2_ref, o_ref, acc_ref):
    # d_ff-tiled reduction path (when the weights do not fit VMEM):
    # x_ref : (tm, dm_p)      w1_ref: (dm_p, tf)   b1_ref: (1, tf)
    # w2_ref: (tf, dm_p)      b2_ref: (1, dm_p)
    # o_ref : (tm, dm_p)      acc_ref: (tm, dm_p) f32 scratch
    f = pl.program_id(1)

    @pl.when(f == 0)
    def _():
        acc_ref[...] = jnp.zeros_like(acc_ref)

    h = jnp.dot(x_ref[...], w1_ref[...],
                preferred_element_type=jnp.float32) + b1_ref[...]
    g = _gelu_tanh(h)
    # dropout == identity in eval mode
    acc_ref[...] += jnp.dot(g.astype(w2_ref.dtype), w2_ref[...],
                            preferred_element_type=jnp.float32)

    @pl.when(f == pl.num_programs(1) - 1)
    def _():
        o_ref[...] = (acc_ref[...] + b2_ref[...]).astype(o_ref.dtype)


# --------------------------------------------------------------------------
# Host-side wrappers
# --------------------------------------------------------------------------

def prepare_ffn_params(w1, b1, w2, b2, *, compute_dtype=jnp.bfloat16):
    """Pad + cast weights once (hoisted out of the per-call hot path).

    w1: [d_model, d_ff]; b1: [d_ff]; w2: [d_ff, d_model]; b2: [d_model].
    Weights are stored pre-transposed vs. PyTorch's nn.Linear ([out, in]), so
    the kernel computes plain row-major x @ W + b.
    """
    d_model, d_ff = w1.shape
    dm_p = _round_up(d_model, 128)
    dff_p = _round_up(d_ff, 128)
    cdt = jnp.dtype(compute_dtype)
    w1p = jnp.pad(w1, ((0, dm_p - d_model), (0, dff_p - d_ff))).astype(cdt)
    w2p = jnp.pad(w2, ((0, dff_p - d_ff), (0, dm_p - d_model))).astype(cdt)
    b1p = jnp.pad(b1, (0, dff_p - d_ff)).astype(jnp.float32).reshape(1, dff_p)
    b2p = jnp.pad(b2, (0, dm_p - d_model)).astype(jnp.float32).reshape(1, dm_p)
    return {"w1": w1p, "b1": b1p, "w2": w2p, "b2": b2p,
            "d_model": d_model, "d_ff": d_ff, "compute_dtype": cdt}


def positionwise_feed_forward(x, params, *, tm=512, tf=1024,
                              weights_resident=None,
                              vmem_limit_bytes=48 * 1024 * 1024):
    """x: [B, S, d_model]; params: output of prepare_ffn_params."""
    B, S, d_model = x.shape
    assert d_model == params["d_model"]
    w1p, b1p, w2p, b2p = params["w1"], params["b1"], params["w2"], params["b2"]
    cdt = params["compute_dtype"]
    dm_p, dff_p = w1p.shape
    out_dtype = x.dtype
    M = B * S

    # Row tile: lane-dense last dims stay dm_p (>=128 multiple); rows to 8.
    tm = min(tm, _round_up(M, 8))
    m_p = _round_up(M, tm)
    # Keep >=2 row tiles when tiles are large so v7x's 2 TensorCores both work
    # (split rounded to 256 so v6e's 2x256x256 MXU stays fully fed).
    if m_p // tm < 2 and tm >= 512:
        tm = max(256, _round_up(tm // 2, 256))
        m_p = _round_up(M, tm)

    x2 = jnp.pad(x.reshape(M, d_model),
                 ((0, m_p - M), (0, dm_p - d_model))).astype(cdt)

    itemsize = jnp.dtype(cdt).itemsize
    out_itemsize = jnp.dtype(out_dtype).itemsize

    if weights_resident is None:
        # Budget check: double-buffered W1+W2, double-buffered x/out tiles,
        # plus the (tm, dff_p) hidden intermediates (f32 h + compute-dtype g).
        w_bytes = 2 * 2 * dm_p * dff_p * itemsize
        io_bytes = 2 * tm * dm_p * (itemsize + out_itemsize)
        hid_bytes = tm * dff_p * (4 + itemsize)
        weights_resident = (w_bytes + io_bytes + hid_bytes
                            <= int(0.9 * vmem_limit_bytes))

    if weights_resident:
        grid = (m_p // tm,)
        cost = pl.CostEstimate(
            flops=4 * m_p * dm_p * dff_p,              # two matmuls: 2*M*K*N each
            transcendentals=m_p * dff_p,               # tanh per hidden element
            bytes_accessed=(m_p * dm_p * itemsize      # x
                            + 2 * dm_p * dff_p * itemsize   # W1 + W2 (once)
                            + (dff_p + dm_p) * 4            # biases
                            + m_p * dm_p * out_itemsize),   # out
        )
        out2 = pl.pallas_call(
            _ffn_resident_kernel,
            out_shape=jax.ShapeDtypeStruct((m_p, dm_p), out_dtype),
            grid_spec=pltpu.PrefetchScalarGridSpec(
                num_scalar_prefetch=0,
                grid=grid,
                in_specs=[
                    pl.BlockSpec((tm, dm_p), lambda i: (i, 0)),     # x rows
                    pl.BlockSpec((dm_p, dff_p), lambda i: (0, 0)),  # W1 (resident)
                    pl.BlockSpec((1, dff_p), lambda i: (0, 0)),     # b1
                    pl.BlockSpec((dff_p, dm_p), lambda i: (0, 0)),  # W2 (resident)
                    pl.BlockSpec((1, dm_p), lambda i: (0, 0)),      # b2
                ],
                out_specs=pl.BlockSpec((tm, dm_p), lambda i: (i, 0)),
            ),
            compiler_params=pltpu.CompilerParams(
                dimension_semantics=("parallel",),
                vmem_limit_bytes=vmem_limit_bytes,
            ),
            cost_estimate=cost,
        )(x2, w1p, b1p, w2p, b2p)
    else:
        # d_ff-tiled reduction path: pick tf as a multiple of 128 dividing dff_p.
        tf = min(tf, dff_p)
        while dff_p % tf:
            tf -= 128
        grid = (m_p // tm, dff_p // tf)
        refetch = m_p // tm                            # W1/W2 streamed once per row tile
        cost = pl.CostEstimate(
            flops=4 * m_p * dm_p * dff_p,
            transcendentals=m_p * dff_p,
            bytes_accessed=(m_p * dm_p * itemsize
                            + refetch * 2 * dm_p * dff_p * itemsize
                            + (dff_p + dm_p) * 4
                            + m_p * dm_p * out_itemsize),
        )
        out2 = pl.pallas_call(
            _ffn_tiled_kernel,
            out_shape=jax.ShapeDtypeStruct((m_p, dm_p), out_dtype),
            grid_spec=pltpu.PrefetchScalarGridSpec(
                num_scalar_prefetch=0,
                grid=grid,                                          # (M tiles, d_ff tiles)
                in_specs=[
                    pl.BlockSpec((tm, dm_p), lambda i, f: (i, 0)),  # x rows
                    pl.BlockSpec((dm_p, tf), lambda i, f: (0, f)),  # W1 column block
                    pl.BlockSpec((1, tf), lambda i, f: (0, f)),     # b1 slice
                    pl.BlockSpec((tf, dm_p), lambda i, f: (f, 0)),  # W2 row block
                    pl.BlockSpec((1, dm_p), lambda i, f: (0, 0)),   # b2
                ],
                out_specs=pl.BlockSpec((tm, dm_p), lambda i, f: (i, 0)),
                scratch_shapes=[pltpu.VMEM((tm, dm_p), jnp.float32)],
            ),
            compiler_params=pltpu.CompilerParams(
                dimension_semantics=("parallel", "arbitrary"),      # reduction axis last
                vmem_limit_bytes=vmem_limit_bytes,
            ),
            cost_estimate=cost,
        )(x2, w1p, b1p, w2p, b2p)

    return out2[:M, :d_model].reshape(B, S, d_model)


# --------------------------------------------------------------------------
# Reference + self-test
# --------------------------------------------------------------------------

def _reference(x, w1, b1, w2, b2):
    h = jnp.einsum("bsd,df->bsf", x, w1) + b1
    c = math.sqrt(2.0 / math.pi)
    g = 0.5 * h * (1.0 + jnp.tanh(c * (h + 0.044715 * h ** 3)))
    return jnp.einsum("bsf,fd->bsd", g, w2) + b2


if __name__ == "__main__":
    key = jax.random.PRNGKey(0)
    B, S, d_model, d_ff = 2, 8, 32, 64

    kx, k1, kb1, k2, kb2 = jax.random.split(key, 5)
    x = jax.random.normal(kx, (B, S, d_model), dtype=jnp.float32)

    # Deterministic "Linear"-style params (PyTorch weight is [out, in];
    # we store the transpose so the kernel does x @ W + b).
    bound1 = 1.0 / math.sqrt(d_model)
    w1 = jax.random.uniform(k1, (d_model, d_ff), jnp.float32, -bound1, bound1)
    b1 = jax.random.uniform(kb1, (d_ff,), jnp.float32, -bound1, bound1)
    bound2 = 1.0 / math.sqrt(d_ff)
    w2 = jax.random.uniform(k2, (d_ff, d_model), jnp.float32, -bound2, bound2)
    b2 = jax.random.uniform(kb2, (d_model,), jnp.float32, -bound2, bound2)

    ref = _reference(x, w1, b1, w2, b2)

    # f32 operands, weights-resident fast path (tight tolerance).
    params_f32 = prepare_ffn_params(w1, b1, w2, b2, compute_dtype=jnp.float32)
    out_f32 = jax.block_until_ready(positionwise_feed_forward(x, params_f32))
    assert out_f32.shape == (B, S, d_model)
    assert jnp.allclose(out_f32, ref, atol=1e-4, rtol=1e-4), "f32 resident mismatch"

    # f32 operands, forced d_ff-tiled reduction path (tight tolerance).
    out_tiled = jax.block_until_ready(
        positionwise_feed_forward(x, params_f32, weights_resident=False))
    assert jnp.allclose(out_tiled, ref, atol=1e-4, rtol=1e-4), "f32 tiled mismatch"

    # Default bf16 MXU operands (expected precision loss -> looser tolerance).
    params_bf16 = prepare_ffn_params(w1, b1, w2, b2)   # compute_dtype=bfloat16
    out_bf16 = jax.block_until_ready(positionwise_feed_forward(x, params_bf16))
    assert jnp.allclose(out_bf16, ref, atol=3e-2, rtol=3e-2), "bf16 mismatch"

    print("KERNEL_OK")
</pallas_src>

<mosaic_0001>
module attributes {stable_mosaic.version = 11 : i64} {
  func.func @_ffn_resident_kernel(%arg0: i32, %arg1: memref<16x128xf32, #tpu.memory_space<vmem>>, %arg2: memref<128x128xf32, #tpu.memory_space<vmem>>, %arg3: memref<1x128xf32, #tpu.memory_space<vmem>>, %arg4: memref<128x128xf32, #tpu.memory_space<vmem>>, %arg5: memref<1x128xf32, #tpu.memory_space<vmem>>, %arg6: memref<16x128xf32, #tpu.memory_space<vmem>>) attributes {dimension_semantics = [#tpu.dimension_semantics<parallel>], iteration_bounds = array<i64: 1>, scalar_prefetch = 0 : i64, scratch_operands = 0 : i64, tpu.core_type = #tpu.core_type<tc>, window_params = [{transform_indices = @transform_0, window_bounds = array<i64: 16, 128>}, {pipeline_mode = #tpu.pipeline_mode<synchronous>, transform_indices = @transform_1, window_bounds = array<i64: 128, 128>}, {pipeline_mode = #tpu.pipeline_mode<synchronous>, transform_indices = @transform_2, window_bounds = array<i64: 1, 128>}, {pipeline_mode = #tpu.pipeline_mode<synchronous>, transform_indices = @transform_3, window_bounds = array<i64: 128, 128>}, {pipeline_mode = #tpu.pipeline_mode<synchronous>, transform_indices = @transform_4, window_bounds = array<i64: 1, 128>}, {transform_indices = @transform_5, window_bounds = array<i64: 16, 128>}]} {
    %c0 = arith.constant 0 : index
    %c0_0 = arith.constant 0 : index
    %0 = vector.load %arg1[%c0, %c0_0] : memref<16x128xf32, #tpu.memory_space<vmem>>, vector<16x128xf32>
    %c0_1 = arith.constant 0 : index
    %c0_2 = arith.constant 0 : index
    %1 = vector.load %arg2[%c0_1, %c0_2] : memref<128x128xf32, #tpu.memory_space<vmem>>, vector<128x128xf32>
    %cst = arith.constant dense<0.000000e+00> : vector<16x128xf32>
    %2 = tpu.matmul %0, %1, %cst {dimension_numbers = #tpu.dot_dimension_numbers<[1], [0], [0], [1], [0, 0, 1, 1], [], []>} : vector<16x128xf32>, vector<128x128xf32>, vector<16x128xf32> -> vector<16x128xf32>
    %c0_3 = arith.constant 0 : index
    %c0_4 = arith.constant 0 : index
    %3 = vector.load %arg3[%c0_3, %c0_4] : memref<1x128xf32, #tpu.memory_space<vmem>>, vector<1x128xf32>
    %4 = vector.broadcast %3 : vector<1x128xf32> to vector<16x128xf32>
    %5 = arith.addf %2, %4 : vector<16x128xf32>
    %cst_5 = arith.constant 5.000000e-01 : f32
    %6 = vector.broadcast %cst_5 : f32 to vector<16x128xf32>
    %7 = arith.mulf %6, %5 : vector<16x128xf32>
    %8 = arith.mulf %5, %5 : vector<16x128xf32>
    %9 = arith.mulf %8, %5 : vector<16x128xf32>
    %cst_6 = arith.constant 4.471500e-02 : f32
    %10 = vector.broadcast %cst_6 : f32 to vector<16x128xf32>
    %11 = arith.mulf %10, %9 : vector<16x128xf32>
    %12 = arith.addf %5, %11 : vector<16x128xf32>
    %cst_7 = arith.constant 0.797884583 : f32
    %13 = vector.broadcast %cst_7 : f32 to vector<16x128xf32>
    %14 = arith.mulf %13, %12 : vector<16x128xf32>
    %15 = math.tanh %14 : vector<16x128xf32>
    %16 = arith.mulf %7, %15 : vector<16x128xf32>
    %17 = arith.addf %7, %16 : vector<16x128xf32>
    %c0_8 = arith.constant 0 : index
    %c0_9 = arith.constant 0 : index
    %18 = vector.load %arg4[%c0_8, %c0_9] : memref<128x128xf32, #tpu.memory_space<vmem>>, vector<128x128xf32>
    %cst_10 = arith.constant dense<0.000000e+00> : vector<16x128xf32>
    %19 = tpu.matmul %17, %18, %cst_10 {dimension_numbers = #tpu.dot_dimension_numbers<[1], [0], [0], [1], [0, 0, 1, 1], [], []>} : vector<16x128xf32>, vector<128x128xf32>, vector<16x128xf32> -> vector<16x128xf32>
    %c0_11 = arith.constant 0 : index
    %c0_12 = arith.constant 0 : index
    %20 = vector.load %arg5[%c0_11, %c0_12] : memref<1x128xf32, #tpu.memory_space<vmem>>, vector<1x128xf32>
    %21 = vector.broadcast %20 : vector<1x128xf32> to vector<16x128xf32>
    %22 = arith.addf %19, %21 : vector<16x128xf32>
    %c0_13 = arith.constant 0 : index
    %c0_14 = arith.constant 0 : index
    %23 = vector.load %arg6[%c0_13, %c0_14] : memref<16x128xf32, #tpu.memory_space<vmem>>, vector<16x128xf32>
    tpu.vector_store %arg6[%c0_13, %c0_14], %22 {strides = array<i32>} : memref<16x128xf32, #tpu.memory_space<vmem>>, vector<16x128xf32>,
    return
  }
  func.func @transform_0(%arg0: i32) -> (i32, i32) {
    %c0_i32 = arith.constant 0 : i32
    %c0_i32_0 = arith.constant 0 : i32
    return %arg0, %c0_i32 : i32, i32
  }
  func.func @transform_1(%arg0: i32) -> (i32, i32) {
    %c0_i32 = arith.constant 0 : i32
    %c0_i32_0 = arith.constant 0 : i32
    %c0_i32_1 = arith.constant 0 : i32
    return %c0_i32, %c0_i32_0 : i32, i32
  }
  func.func @transform_2(%arg0: i32) -> (i32, i32) {
    %c0_i32 = arith.constant 0 : i32
    %c0_i32_0 = arith.constant 0 : i32
    %c0_i32_1 = arith.constant 0 : i32
    return %c0_i32, %c0_i32_0 : i32, i32
  }
  func.func @transform_3(%arg0: i32) -> (i32, i32) {
    %c0_i32 = arith.constant 0 : i32
    %c0_i32_0 = arith.constant 0 : i32
    %c0_i32_1 = arith.constant 0 : i32
    return %c0_i32, %c0_i32_0 : i32, i32
  }
  func.func @transform_4(%arg0: i32) -> (i32, i32) {
    %c0_i32 = arith.constant 0 : i32
    %c0_i32_0 = arith.constant 0 : i32
    %c0_i32_1 = arith.constant 0 : i32
    return %c0_i32, %c0_i32_0 : i32, i32
  }
  func.func @transform_5(%arg0: i32) -> (i32, i32) {
    %c0_i32 = arith.constant 0 : i32
    %c0_i32_0 = arith.constant 0 : i32
    return %arg0, %c0_i32 : i32, i32
  }
}

</mosaic_0001>

<llo_original>
// kernel: tpu_custom_call.1
$region0: #{tpu_custom_call.1}
  #allocation0 [shape = 'u32[]', space=smem, size = 0x4, offset = 0x4, fixed_abs, tag = 'smem constant byte address 0x4 - core index']
  #allocation1 [shape = 'u32[72,128]{1,0:T(1,128)}', space=vmem, size = 0x9000, scoped, tag = 'internal scratch']
  %s0 = inlined_call_operand.hbm [shape: f32[16,128], index: 0, kind: input, shape index: {}]
  %s1 = inlined_call_operand.hbm [shape: f32[128,128], index: 1, kind: input, shape index: {}]
  %s2 = inlined_call_operand.vmem [shape: f32[1,128], index: 2, kind: input, shape index: {}]
  %s3 = inlined_call_operand.hbm [shape: f32[128,128], index: 3, kind: input, shape index: {}]
  %s4 = inlined_call_operand.vmem [shape: f32[1,128], index: 4, kind: input, shape index: {}]
  %s5 = inlined_call_operand.hbm [shape: f32[16,128], index: 5, kind: output, shape index: {}]
  %s6 = sld [smem:[#allocation0]]
  $region42: #{tpu_custom_call.1} parent=0
    _
  %s8 = ssub.s32 1, %s6
  %s9 = scalar_select 0, %s8, %s6
  $region1: #{tpu_custom_call.1} parent=0
    #allocation2 [shape = 'u8[8192]{0}', space=vmem, size = 0x2000, scoped, tag = 'input window, operand 0, single buffered']
    #allocation3 [shape = 's32[1]{0}', space=sflag, size = 0x4, scoped, tag = 'scoped memory for tpu_custom_call.1']
    #allocation4 [shape = 's32[1]{0}', space=sflag, size = 0x4, scoped, tag = 'scoped memory for tpu_custom_call.1']
    #allocation5 [shape = 'u8[65536]{0}', space=vmem, size = 0x10000, scoped, tag = 'input window, operand 1, single buffered']
    #allocation6 [shape = 's32[1]{0}', space=sflag, size = 0x4, scoped, tag = 'scoped memory for tpu_custom_call.1']
    #allocation7 [shape = 'u8[65536]{0}', space=vmem, size = 0x10000, scoped, tag = 'input window, operand 3, single buffered']
    #allocation8 [shape = 'u8[8192]{0}', space=vmem, size = 0x2000, scoped, tag = 'output window, operand 0, single buffered']
    %10 = vsyncpa [#allocation3], 0
    %11 = vsyncpa [#allocation6], 0
    %12 = vsyncpa [#allocation4], 0
    // Predicated region
    $region2: #{tpu_custom_call.1} parent=1 // pred_check
      _
    $region3: #{tpu_custom_call.1} parent=1 // pred_check_branch
      %14 = sbr.rel (0) target = $region5
    $region4: #{tpu_custom_call.1} parent=1 // pred_region
      %16 = vsyncadd [#allocation3], 0
      %s17 = sshll.u32 %s0, 4
      %s18 = int_to_ptr.hbm [resolvable:$true] %s17
      %s19 = sshll.u32 [#allocation2], 4
      %s20 = int_to_ptr.vmem [resolvable:$true] %s19
      %25 = dma.hbm_to_vmem [thread:$0]  %s18, 256, %s20, [#allocation3], 128, 128, 8
    $region5: #{tpu_custom_call.1} parent=1 // pred_fallthru
      _
    // Predicated region
    $region6: #{tpu_custom_call.1} parent=1 // pred_check
      _
    $region7: #{tpu_custom_call.1} parent=1 // pred_check_branch
      %27 = sbr.rel (0) target = $region9
    $region8: #{tpu_custom_call.1} parent=1 // pred_region
      %29 = vsyncadd [#allocation6], 0
      %s30 = sshll.u32 %s1, 4
      %s31 = int_to_ptr.hbm [resolvable:$true] %s30
      %s32 = sshll.u32 [#allocation5], 4
      %s33 = int_to_ptr.vmem [resolvable:$true] %s32
      %38 = dma.hbm_to_vmem [thread:$0]  %s31, 2048, %s33, [#allocation6], 128, 128, 8
    $region9: #{tpu_custom_call.1} parent=1 // pred_fallthru
      _
    // Predicated region
    $region10: #{tpu_custom_call.1} parent=1 // pred_check
      _
    $region11: #{tpu_custom_call.1} parent=1 // pred_check_branch
      %40 = sbr.rel (0) target = $region13
    $region12: #{tpu_custom_call.1} parent=1 // pred_region
      _
    $region13: #{tpu_custom_call.1} parent=1 // pred_fallthru
      _
    // Predicated region
    $region14: #{tpu_custom_call.1} parent=1 // pred_check
      _
    $region15: #{tpu_custom_call.1} parent=1 // pred_check_branch
      %42 = sbr.rel (0) target = $region17
    $region16: #{tpu_custom_call.1} parent=1 // pred_region
      %44 = vsyncadd [#allocation6], 0
      %s45 = sshll.u32 %s3, 4
      %s46 = int_to_ptr.hbm [resolvable:$true] %s45
      %s47 = sshll.u32 [#allocation7], 4
      %s48 = int_to_ptr.vmem [resolvable:$true] %s47
      %53 = dma.hbm_to_vmem [thread:$0]  %s46, 2048, %s48, [#allocation6], 128, 128, 8
    $region17: #{tpu_custom_call.1} parent=1 // pred_fallthru
      _
    // Predicated region
    $region18: #{tpu_custom_call.1} parent=1 // pred_check
      _
    $region19: #{tpu_custom_call.1} parent=1 // pred_check_branch
      %55 = sbr.rel (0) target = $region21
    $region20: #{tpu_custom_call.1} parent=1 // pred_region
      _
    $region21: #{tpu_custom_call.1} parent=1 // pred_fallthru
      _
    // Predicated region
    $region22: #{tpu_custom_call.1} parent=1 // pred_check
      _
    $region23: #{tpu_custom_call.1} parent=1 // pred_check_branch
      %57 = sbr.rel (0) target = $region25
    $region24: #{tpu_custom_call.1} parent=1 // pred_region
      %59 = dma.done [#allocation3], 256
    $region25: #{tpu_custom_call.1} parent=1 // pred_fallthru
      _
    // Predicated region
    $region26: #{tpu_custom_call.1} parent=1 // pred_check
      _
    $region27: #{tpu_custom_call.1} parent=1 // pred_check_branch
      %61 = sbr.rel (0) target = $region29
    $region28: #{tpu_custom_call.1} parent=1 // pred_region
      %63 = dma.done [#allocation6], 2048
    $region29: #{tpu_custom_call.1} parent=1 // pred_fallthru
      _
    // Predicated region
    $region30: #{tpu_custom_call.1} parent=1 // pred_check
      _
    $region31: #{tpu_custom_call.1} parent=1 // pred_check_branch
      %65 = sbr.rel (0) target = $region33
    $region32: #{tpu_custom_call.1} parent=1 // pred_region
      %67 = dma.done [#allocation6], 2048
    $region33: #{tpu_custom_call.1} parent=1 // pred_fallthru
      _
    %v68 = vld [vmem:[#allocation2] sm:$0xff]
    %v69 = vld [vmem:[#allocation2 + $0x8] sm:$0xff]
    %v70 = vld [vmem:[#allocation5] sm:$0xff]
    %v71 = vld [vmem:[#allocation5 + $0x8] sm:$0xff]
    %v72 = vld [vmem:[#allocation5 + $0x10] sm:$0xff]
    %v73 = vld [vmem:[#allocation5 + $0x18] sm:$0xff]
    %v74 = vld [vmem:[#allocation5 + $0x20] sm:$0xff]
    %v75 = vld [vmem:[#allocation5 + $0x28] sm:$0xff]
    %v76 = vld [vmem:[#allocation5 + $0x30] sm:$0xff]
    %v77 = vld [vmem:[#allocation5 + $0x38] sm:$0xff]
    %v78 = vld [vmem:[#allocation5 + $0x40] sm:$0xff]
    %v79 = vld [vmem:[#allocation5 + $0x48] sm:$0xff]
    %v80 = vld [vmem:[#allocation5 + $0x50] sm:$0xff]
    %v81 = vld [vmem:[#allocation5 + $0x58] sm:$0xff]
    %v82 = vld [vmem:[#allocation5 + $0x60] sm:$0xff]
    %v83 = vld [vmem:[#allocation5 + $0x68] sm:$0xff]
    %v84 = vld [vmem:[#allocation5 + $0x70] sm:$0xff]
    %v85 = vld [vmem:[#allocation5 + $0x78] sm:$0xff]
    %v86 = vld [vmem:[%s2] sm:$0x1]
    %v88 = vperm.slane %v86, 0
    %90 = vmatpush.msra.mxu0 %v85
    %91 = vmatpush.msra.mxu0 %v84
    %92 = vmatpush.msra.mxu0 %v83
    %93 = vmatpush.msra.mxu0 %v82
    %94 = vmatpush.msra.mxu0 %v81
    %95 = vmatpush.msra.mxu0 %v80
    %96 = vmatpush.msra.mxu0 %v79
    %97 = vmatpush.msra.mxu0 %v78
    %98 = vmatpush.msra.mxu0 %v77
    %99 = vmatpush.msra.mxu0 %v76
    %100 = vmatpush.msra.mxu0 %v75
    %101 = vmatpush.msra.mxu0 %v74
    %102 = vmatpush.msra.mxu0 %v73
    %103 = vmatpush.msra.mxu0 %v72
    %104 = vmatpush.msra.mxu0 %v71
    %105 = vmatpush.msra.mxu0 %v70
    %106 = vmatmul.f32.gmra.mxu0 %v68
    %v107 = vpop.f32.mrf.mxu0
    %v108 = vadd.f32 %v88, %v107
    %109 = vmatmul.f32.gmra.mxu0 %v69
    %v110 = vpop.f32.mrf.mxu0
    %v111 = vadd.f32 %v88, %v110
    %112 = vdwg.mxu0
    %v113 = vmul.f32 %v108, 0.5
    %v114 = vmul.f32 %v111, 0.5
    %v115 = vmul.f32 %v108, %v108
    %v116 = vmul.f32 %v111, %v111
    %v117 = vmul.f32 %v115, %v108
    %v118 = vmul.f32 %v116, %v111
    %v119 = vmul.f32 %v117, 0.044715
    %v120 = vmul.f32 %v118, 0.044715
    %v121 = vadd.f32 %v108, %v119
    %v122 = vadd.f32 %v111, %v120
    %v123 = vmul.f32 %v121, 0.7978846
    %v124 = vmul.f32 %v122, 0.7978846
    %v125 = vtanh.pop %v123
    %v126 = vtanh.pop %v124
    %v127 = vmul.f32 %v113, %v125
    %v128 = vmul.f32 %v114, %v126
    %v129 = vadd.f32 %v113, %v127
    %v130 = vadd.f32 %v114, %v128
    %v131 = vld [vmem:[#allocation7] sm:$0xff]
    %v132 = vld [vmem:[#allocation7 + $0x8] sm:$0xff]
    %v133 = vld [vmem:[#allocation7 + $0x10] sm:$0xff]
    %v134 = vld [vmem:[#allocation7 + $0x18] sm:$0xff]
    %v135 = vld [vmem:[#allocation7 + $0x20] sm:$0xff]
    %v136 = vld [vmem:[#allocation7 + $0x28] sm:$0xff]
    %v137 = vld [vmem:[#allocation7 + $0x30] sm:$0xff]
    %v138 = vld [vmem:[#allocation7 + $0x38] sm:$0xff]
    %v139 = vld [vmem:[#allocation7 + $0x40] sm:$0xff]
    %v140 = vld [vmem:[#allocation7 + $0x48] sm:$0xff]
    %v141 = vld [vmem:[#allocation7 + $0x50] sm:$0xff]
    %v142 = vld [vmem:[#allocation7 + $0x58] sm:$0xff]
    %v143 = vld [vmem:[#allocation7 + $0x60] sm:$0xff]
    %v144 = vld [vmem:[#allocation7 + $0x68] sm:$0xff]
    %v145 = vld [vmem:[#allocation7 + $0x70] sm:$0xff]
    %v146 = vld [vmem:[#allocation7 + $0x78] sm:$0xff]
    %v147 = vld [vmem:[%s4] sm:$0x1]
    %v149 = vperm.slane %v147, 0
    %151 = vmatpush.msra.mxu0 %v146
    %152 = vmatpush.msra.mxu0 %v145
    %153 = vmatpush.msra.mxu0 %v144
    %154 = vmatpush.msra.mxu0 %v143
    %155 = vmatpush.msra.mxu0 %v142
    %156 = vmatpush.msra.mxu0 %v141
    %157 = vmatpush.msra.mxu0 %v140
    %158 = vmatpush.msra.mxu0 %v139
    %159 = vmatpush.msra.mxu0 %v138
    %160 = vmatpush.msra.mxu0 %v137
    %161 = vmatpush.msra.mxu0 %v136
    %162 = vmatpush.msra.mxu0 %v135
    %163 = vmatpush.msra.mxu0 %v134
    %164 = vmatpush.msra.mxu0 %v133
    %165 = vmatpush.msra.mxu0 %v132
    %166 = vmatpush.msra.mxu0 %v131
    %167 = vmatmul.f32.gmra.mxu0 %v129
    %v168 = vpop.f32.mrf.mxu0
    %v169 = vadd.f32 %v149, %v168
    %170 = vmatmul.f32.gmra.mxu0 %v130
    %v171 = vpop.f32.mrf.mxu0
    %v172 = vadd.f32 %v149, %v171
    %173 = vdwg.mxu0
    %174 = vst [vmem:[#allocation8] sm:$0xff] %v169
    %175 = vst [vmem:[#allocation8 + $0x8] sm:$0xff] %v172
    // Predicated region
    $region34: #{tpu_custom_call.1} parent=1 // pred_check
      _
    $region35: #{tpu_custom_call.1} parent=1 // pred_check_branch
      %177 = sbr.rel (0) target = $region37
    $region36: #{tpu_custom_call.1} parent=1 // pred_region
      %179 = vsyncadd [#allocation4], 0
      %s180 = sshll.u32 [#allocation8], 4
      %s181 = int_to_ptr.vmem [resolvable:$true] %s180
      %s182 = sshll.u32 %s5, 4
      %s183 = int_to_ptr.hbm [resolvable:$true] %s182
      %188 = dma.vmem_to_hbm [thread:$0]  %s181, 256, %s183, [#allocation4], 128, 128, 8
    $region37: #{tpu_custom_call.1} parent=1 // pred_fallthru
      _
    // Predicated region
    $region38: #{tpu_custom_call.1} parent=1 // pred_check
      _
    $region39: #{tpu_custom_call.1} parent=1 // pred_check_branch
      %190 = sbr.rel (0) target = $region41
    $region40: #{tpu_custom_call.1} parent=1 // pred_region
      %192 = dma.done [#allocation4], 256
    $region41: #{tpu_custom_call.1} parent=1 // pred_fallthru
      _
    %193 = vsyncpa [#allocation3], 1
    %194 = vsyncpa [#allocation6], 1
    %195 = vsyncpa [#allocation4], 1

</llo_original>
